<compile_context>
chip_gen: v6e
topology: v6e:2x2x1
jax: 0.10.0
libtpu: 0.0.40
codegen_flags: <defaults>
</compile_context>

<pallas_src>
import functools

import jax
import jax.numpy as jnp
from jax import lax
from jax.experimental import pallas as pl
from jax.experimental.pallas import tpu as pltpu


# -----------------------------------------------------------------------------
# Config (small shapes consistent with the module's forward)
# -----------------------------------------------------------------------------
BATCH = 2
NUM_FRAMES = 4
IMG_C, IMG_H, IMG_W = 3, 16, 16
D_MODEL = 32              # clip_model.visual.output_dim stand-in
QUERY_PAD_LEN = 8         # query_pad_length
NUM_EXP_TOKENS = 2        # visual_expansion_tokens
N_LAYERS = 2              # temporal_layers
N_HEAD = 4                # temporal_heads
D_FF = 64                 # temporal_ff_dim
VOCAB = 64
TEXT_LEN = 8

_NEG_INF = -1e30          # plain Python float (never a captured jnp constant)


# -----------------------------------------------------------------------------
# Pallas kernel: fused pairwise Mean-Max-Similarity
#   frame_sims[i, j] = mean_q max_l <query[i, q], frame_feats[j, l]>
#   video_sims[i, j] = mean_q max_l <query[i, q], video_feats[j, l]>
#   similarities     = frame_sims + video_sims          (folded into the kernel)
# -----------------------------------------------------------------------------
def _mms_fused_kernel(q_ref, t_ref, bias_ref, out_ref, *,
                      batch, q_len, n_seg, lane_pad):
    """q_ref   : [B*Q, D]   bf16  query tokens, batch-major rows
       t_ref   : [D, Tpad]  bf16  pre-transposed token slab; lane t = w*n_seg + s
                                  (segments 0..B-1 = frame tokens of video s,
                                   B..2B-1 = video tokens of video s-B)
       bias_ref: [1, Tpad]  f32   0 on real token lanes, -1e30 on pad lanes
       out_ref : [3, B, P]  f32   (similarities, frame_sims, video_sims), P=128
    """
    # One MXU contraction ([B*Q, D] @ [D, Tpad], f32 accumulation) replaces the
    # module's B*B*2 tiny bmm's; RHS is already MXU-stationary (no transpose).
    sim = lax.dot_general(q_ref[...], t_ref[...],
                          (((1,), (0,)), ((), ())),
                          preferred_element_type=jnp.float32)     # [B*Q, Tpad]
    x = sim + bias_ref[...]          # single VPU add kills padded token lanes

    # Segmented max over tokens.  The segment id lives in the low lane bits, so
    # a log2(seg_pad) tree of lane-halving maxima reduces all 2B segments at
    # once with static slices only (no iota/where masks, no width-1 concats).
    width = x.shape[1]
    while width > n_seg:
        width //= 2
        x = jnp.maximum(x[:, :width], x[:, width:])
    # x: [B*Q, 2B]; column s<B -> frame segment of video s, s>=B -> video seg.

    # Mean over the Q query tokens of each text: sublane-tile-aligned reshape
    # (Q = 8) + reduce.  No f32 pooling matmul, no extra pool input/DMA.
    pooled = jnp.mean(x.reshape(batch, q_len, n_seg), axis=1)     # [B, 2B] f32
    fs = pooled[:, :batch]                                        # frame sims  [B, B]
    vs = pooled[:, batch:]                                        # video sims  [B, B]

    sims = fs + vs
    if lane_pad > batch:
        # Pad to full 128-lane rows so the epilogue is unmasked vector stores.
        zpad = jnp.zeros((batch, lane_pad - batch), jnp.float32)  # staged, not captured
        sims = jnp.concatenate([sims, zpad], axis=1)
        fs = jnp.concatenate([fs, zpad], axis=1)
        vs = jnp.concatenate([vs, zpad], axis=1)
    out_ref[0] = sims               # similarities
    out_ref[1] = fs                 # frame_similarities
    out_ref[2] = vs                 # video_similarities


def pairwise_mean_max_sim(query_features, frame_features, video_features):
    """query [B,Q,D], frames [B,Lf,D], video [B,Lv,D] -> (sims, fs, vs), each [B,B]."""
    B, Q, D = query_features.shape
    Lf = frame_features.shape[1]
    Lv = video_features.shape[1]
    n_seg = 2 * B

    # Per-segment token slot count: power of two (so the in-kernel halving max
    # works) and large enough that the total lane count is a multiple of 128
    # (lane-dense MXU operand).
    seg_pad = pl.next_power_of_2(max(Lf, Lv))
    while (n_seg * seg_pad) % 128 != 0:
        seg_pad *= 2
    t_pad = n_seg * seg_pad

    # ---- layout plumbing (plain JAX, outside the kernel) ----
    f_pad = jnp.pad(frame_features, ((0, 0), (0, seg_pad - Lf), (0, 0)))  # [B, seg_pad, D]
    v_pad = jnp.pad(video_features, ((0, 0), (0, seg_pad - Lv), (0, 0)))  # [B, seg_pad, D]
    tok = jnp.concatenate([f_pad, v_pad], axis=0)                         # [2B, seg_pad, D]
    # Interleave segments along the lane axis (lane t = w*n_seg + s) so the
    # in-kernel fold reduces every segment simultaneously.
    tok = tok.transpose(1, 0, 2).reshape(t_pad, D)
    t_slab = tok.T.astype(jnp.bfloat16)                                   # [D, Tpad]

    q2 = query_features.reshape(B * Q, D).astype(jnp.bfloat16)            # [B*Q, D]

    # Precomputed additive -inf bias (hoisted out of the kernel): 0 on real
    # token lanes, -1e30 on padded lanes so zero-pad lanes can never win a max.
    w_idx = jnp.arange(t_pad, dtype=jnp.int32) // n_seg
    s_idx = jnp.arange(t_pad, dtype=jnp.int32) % n_seg
    limit = jnp.where(s_idx < B, Lf, Lv)
    bias = jnp.where(w_idx < limit, 0.0, _NEG_INF).astype(jnp.float32)[None, :]

    lane_pad = pl.cdiv(B, 128) * 128     # lane-dense output width (128 here)

    kernel = functools.partial(_mms_fused_kernel, batch=B, q_len=Q,
                               n_seg=n_seg, lane_pad=lane_pad)
    out = pl.pallas_call(
        kernel,
        out_shape=jax.ShapeDtypeStruct((3, B, lane_pad), jnp.float32),
        in_specs=[pl.BlockSpec(memory_space=pltpu.MemorySpace.VMEM)] * 3,
        out_specs=pl.BlockSpec(memory_space=pltpu.MemorySpace.VMEM),
    )(q2, t_slab, bias)
    # TODO(synk): at production shapes (D=512/768, hundreds of tokens, B>=32),
    # tile the token axis as the LAST ("arbitrary") grid axis with a running
    # per-segment max in f32 VMEM scratch, mark the query-batch axis
    # "parallel" (v7x megacore), and derive tile sizes per generation
    # (vmem_limit_bytes; v7x has 64 MiB VMEM vs 128 MiB on v5e/v6e).
    res = out[:, :, :B]                  # slice lane padding back off (wrapper side)
    return res[0], res[1], res[2]


# -----------------------------------------------------------------------------
# Plain-JAX glue: synthetic CLIP encoders + temporal transformer encoder
# -----------------------------------------------------------------------------
def _l2_normalize(x, eps=1e-12):
    # matches F.normalize(x, dim=-1): x / max(||x||_2, eps)
    n = jnp.linalg.norm(x, axis=-1, keepdims=True)
    return x / jnp.maximum(n, eps)


def _layer_norm(x, gamma, beta, eps=1e-5):
    mu = jnp.mean(x, axis=-1, keepdims=True)
    var = jnp.mean((x - mu) ** 2, axis=-1, keepdims=True)
    return (x - mu) / jnp.sqrt(var + eps) * gamma + beta


def _mha(x, p, nhead):
    B, L, D = x.shape
    qkv = x @ p["in_proj_w"].T + p["in_proj_b"]           # [B, L, 3D]
    q, k, v = jnp.split(qkv, 3, axis=-1)
    hd = D // nhead

    def split_heads(t):
        return t.reshape(B, L, nhead, hd).transpose(0, 2, 1, 3)  # [B, H, L, hd]

    q, k, v = split_heads(q), split_heads(k), split_heads(v)
    scores = jnp.einsum("bhqd,bhkd->bhqk", q, k) / jnp.sqrt(float(hd))
    attn = jax.nn.softmax(scores, axis=-1)
    out = jnp.einsum("bhqk,bhkd->bhqd", attn, v)
    out = out.transpose(0, 2, 1, 3).reshape(B, L, D)
    return out @ p["out_proj_w"].T + p["out_proj_b"]


def _encoder_layer(x, p, nhead):
    # PyTorch TransformerEncoderLayer, norm_first=False, activation=relu,
    # dropout disabled (eval).
    x = _layer_norm(x + _mha(x, p, nhead), p["ln1_g"], p["ln1_b"])
    ff = jax.nn.relu(x @ p["lin1_w"].T + p["lin1_b"]) @ p["lin2_w"].T + p["lin2_b"]
    x = _layer_norm(x + ff, p["ln2_g"], p["ln2_b"])
    return x


def encode_query(params, token_ids):
    """token_ids [B, T] int32 -> normalized query features [B, Q, D]."""
    emb = params["text_embed"][token_ids]                 # [B, T, D]
    text_features = jnp.mean(emb, axis=1) @ params["text_proj"]  # [B, D]
    q = text_features[:, None, :]                         # [B, 1, D]
    q = jnp.broadcast_to(q, (q.shape[0], QUERY_PAD_LEN, q.shape[-1]))
    return _l2_normalize(q)                               # [B, Q, D]


def encode_video(params, frames):
    """frames [B, F, 3, H, W] -> (frame_feats [B,F,D], video_feats [B,F+E,D])."""
    B, F = frames.shape[0], frames.shape[1]
    frames_flat = frames.reshape(B * F, -1)               # [B*F, 3*H*W]
    feats_flat = frames_flat @ params["img_proj"] + params["img_bias"]
    frame_feats = feats_flat.reshape(B, F, D_MODEL)       # [B, F, D]

    exp = jnp.broadcast_to(params["vis_exp_tokens"], (B, NUM_EXP_TOKENS, D_MODEL))
    x = jnp.concatenate([frame_feats, exp], axis=1)       # [B, F+E, D]
    for lp in params["layers"]:
        x = _encoder_layer(x, lp, N_HEAD)
    video_feats = x

    return _l2_normalize(frame_feats), _l2_normalize(video_feats)


def video_colbert_features(params, token_ids, frames):
    q = encode_query(params, token_ids)
    f, v = encode_video(params, frames)
    return q, f, v


@jax.jit
def video_colbert_forward(params, token_ids, frames):
    q, f, v = video_colbert_features(params, token_ids, frames)
    similarities, frame_sims, video_sims = pairwise_mean_max_sim(q, f, v)
    return similarities, frame_sims, video_sims


# -----------------------------------------------------------------------------
# Deterministic parameter init (shapes follow the module's __init__)
# -----------------------------------------------------------------------------
def init_params(key):
    ks = iter(jax.random.split(key, 8 + 8 * N_LAYERS))

    def nrm(shape, std=0.02):
        return (std * jax.random.normal(next(ks), shape)).astype(jnp.float32)

    params = {
        "text_embed": nrm((VOCAB, D_MODEL)),
        "text_proj": nrm((D_MODEL, D_MODEL)),
        "img_proj": nrm((IMG_C * IMG_H * IMG_W, D_MODEL)),
        "img_bias": jnp.zeros((D_MODEL,), jnp.float32),
        "vis_exp_tokens": nrm((1, NUM_EXP_TOKENS, D_MODEL)),  # std=0.02 as in module
        "temperature": jnp.array([4.77], jnp.float32),  # declared, unused in forward
        "bias": jnp.array([-12.93], jnp.float32),       # declared, unused in forward
        "layers": [],
    }
    for _ in range(N_LAYERS):
        lp = {
            "in_proj_w": nrm((3 * D_MODEL, D_MODEL)),
            "in_proj_b": jnp.zeros((3 * D_MODEL,), jnp.float32),
            "out_proj_w": nrm((D_MODEL, D_MODEL)),
            "out_proj_b": jnp.zeros((D_MODEL,), jnp.float32),
            "lin1_w": nrm((D_FF, D_MODEL)),
            "lin1_b": jnp.zeros((D_FF,), jnp.float32),
            "lin2_w": nrm((D_MODEL, D_FF)),
            "lin2_b": jnp.zeros((D_MODEL,), jnp.float32),
            "ln1_g": jnp.ones((D_MODEL,), jnp.float32),
            "ln1_b": jnp.zeros((D_MODEL,), jnp.float32),
            "ln2_g": jnp.ones((D_MODEL,), jnp.float32),
            "ln2_b": jnp.zeros((D_MODEL,), jnp.float32),
        }
        params["layers"].append(lp)
    return params


def tokenize(texts, length=TEXT_LEN, vocab=VOCAB):
    ids = []
    for t in texts:
        t = (t + " " * length)[:length]
        ids.append([ord(c) % vocab for c in t])
    return jnp.asarray(ids, jnp.int32)


# -----------------------------------------------------------------------------
# Main
# -----------------------------------------------------------------------------
if __name__ == "__main__":
    root = jax.random.PRNGKey(0)
    k_params, k_frames = jax.random.split(root)

    params = init_params(k_params)
    texts = ["a cat playing a piano", "a dog running in the park"]
    token_ids = tokenize(texts)                                   # [2, 8]
    frames = jax.random.normal(
        k_frames, (BATCH, NUM_FRAMES, IMG_C, IMG_H, IMG_W), jnp.float32)

    sims, frame_sims, video_sims = video_colbert_forward(params, token_ids, frames)
    jax.block_until_ready((sims, frame_sims, video_sims))

    # Pure-JAX reference for the Pallas MMS hot path.
    q, f, v = video_colbert_features(params, token_ids, frames)

    def ref_pairwise_mms(qf, vf):
        sim = jnp.einsum("iqd,jld->ijql", qf, vf)
        return jnp.mean(jnp.max(sim, axis=3), axis=2)

    # Exact-math reference using the same bf16 input quantization as the kernel.
    qb = q.astype(jnp.bfloat16).astype(jnp.float32)
    fb = f.astype(jnp.bfloat16).astype(jnp.float32)
    vb = v.astype(jnp.bfloat16).astype(jnp.float32)
    ref_f = ref_pairwise_mms(qb, fb)
    ref_v = ref_pairwise_mms(qb, vb)
    assert jnp.allclose(frame_sims, ref_f, atol=2e-3, rtol=2e-3), "frame MMS mismatch"
    assert jnp.allclose(video_sims, ref_v, atol=2e-3, rtol=2e-3), "video MMS mismatch"
    assert jnp.allclose(sims, ref_f + ref_v, atol=2e-3, rtol=2e-3), "total sim mismatch"

    # Sanity check against the full-f32 reference (bf16 input quantization only).
    ref_f32 = ref_pairwise_mms(q, f) + ref_pairwise_mms(q, v)
    assert jnp.allclose(sims, ref_f32, atol=5e-2, rtol=5e-2), "f32 sanity mismatch"

    print("KERNEL_OK")
</pallas_src>

<mosaic_0001>
module attributes {stable_mosaic.version = 11 : i64} {
  func.func @_mms_fused_kernel(%arg0: memref<16x32xbf16, #tpu.memory_space<vmem>>, %arg1: memref<32x128xbf16, #tpu.memory_space<vmem>>, %arg2: memref<1x128xf32, #tpu.memory_space<vmem>>, %arg3: memref<3x2x128xf32, #tpu.memory_space<vmem>>) attributes {dimension_semantics = [], scalar_prefetch = 0 : i64, scratch_operands = 0 : i64, tpu.core_type = #tpu.core_type<tc>} {
    %c0 = arith.constant 0 : index
    %c0_0 = arith.constant 0 : index
    %0 = vector.load %arg0[%c0, %c0_0] : memref<16x32xbf16, #tpu.memory_space<vmem>>, vector<16x32xbf16>
    %c0_1 = arith.constant 0 : index
    %c0_2 = arith.constant 0 : index
    %1 = vector.load %arg1[%c0_1, %c0_2] : memref<32x128xbf16, #tpu.memory_space<vmem>>, vector<32x128xbf16>
    %cst = arith.constant dense<0.000000e+00> : vector<16x128xf32>
    %2 = tpu.matmul %0, %1, %cst {dimension_numbers = #tpu.dot_dimension_numbers<[1], [0], [0], [1], [0, 0, 1, 1], [], []>} : vector<16x32xbf16>, vector<32x128xbf16>, vector<16x128xf32> -> vector<16x128xf32>
    %c0_3 = arith.constant 0 : index
    %c0_4 = arith.constant 0 : index
    %3 = vector.load %arg2[%c0_3, %c0_4] : memref<1x128xf32, #tpu.memory_space<vmem>>, vector<1x128xf32>
    %4 = vector.broadcast %3 : vector<1x128xf32> to vector<16x128xf32>
    %5 = arith.addf %2, %4 : vector<16x128xf32>
    %6 = vector.extract_strided_slice %5 {offsets = [0, 0], sizes = [16, 64], strides = [1, 1]} : vector<16x128xf32> to vector<16x64xf32>
    %7 = vector.extract_strided_slice %5 {offsets = [0, 64], sizes = [16, 64], strides = [1, 1]} : vector<16x128xf32> to vector<16x64xf32>
    %8 = arith.maximumf %6, %7 : vector<16x64xf32>
    %9 = vector.extract_strided_slice %8 {offsets = [0, 0], sizes = [16, 32], strides = [1, 1]} : vector<16x64xf32> to vector<16x32xf32>
    %10 = vector.extract_strided_slice %8 {offsets = [0, 32], sizes = [16, 32], strides = [1, 1]} : vector<16x64xf32> to vector<16x32xf32>
    %11 = arith.maximumf %9, %10 : vector<16x32xf32>
    %12 = vector.extract_strided_slice %11 {offsets = [0, 0], sizes = [16, 16], strides = [1, 1]} : vector<16x32xf32> to vector<16x16xf32>
    %13 = vector.extract_strided_slice %11 {offsets = [0, 16], sizes = [16, 16], strides = [1, 1]} : vector<16x32xf32> to vector<16x16xf32>
    %14 = arith.maximumf %12, %13 : vector<16x16xf32>
    %15 = vector.extract_strided_slice %14 {offsets = [0, 0], sizes = [16, 8], strides = [1, 1]} : vector<16x16xf32> to vector<16x8xf32>
    %16 = vector.extract_strided_slice %14 {offsets = [0, 8], sizes = [16, 8], strides = [1, 1]} : vector<16x16xf32> to vector<16x8xf32>
    %17 = arith.maximumf %15, %16 : vector<16x8xf32>
    %18 = vector.extract_strided_slice %17 {offsets = [0, 0], sizes = [16, 4], strides = [1, 1]} : vector<16x8xf32> to vector<16x4xf32>
    %19 = vector.extract_strided_slice %17 {offsets = [0, 4], sizes = [16, 4], strides = [1, 1]} : vector<16x8xf32> to vector<16x4xf32>
    %20 = arith.maximumf %18, %19 : vector<16x4xf32>
    %21 = vector.shape_cast %20 : vector<16x4xf32> to vector<2x8x4xf32>
    %cst_5 = arith.constant dense<0.000000e+00> : vector<2x4xf32>
    %22 = vector.multi_reduction <add>, %21, %cst_5 [1] : vector<2x8x4xf32> to vector<2x4xf32>
    %cst_6 = arith.constant 8.000000e+00 : f32
    %23 = vector.broadcast %cst_6 : f32 to vector<2x4xf32>
    %24 = arith.divf %22, %23 : vector<2x4xf32>
    %25 = vector.extract_strided_slice %24 {offsets = [0, 0], sizes = [2, 2], strides = [1, 1]} : vector<2x4xf32> to vector<2x2xf32>
    %26 = vector.extract_strided_slice %24 {offsets = [0, 2], sizes = [2, 2], strides = [1, 1]} : vector<2x4xf32> to vector<2x2xf32>
    %27 = arith.addf %25, %26 : vector<2x2xf32>
    %cst_7 = arith.constant 0.000000e+00 : f32
    %28 = vector.broadcast %cst_7 : f32 to vector<2x126xf32>
    %29 = tpu.concatenate %27, %28 in 1 : vector<2x2xf32>, vector<2x126xf32> -> vector<2x128xf32>
    %30 = tpu.concatenate %25, %28 in 1 : vector<2x2xf32>, vector<2x126xf32> -> vector<2x128xf32>
    %31 = tpu.concatenate %26, %28 in 1 : vector<2x2xf32>, vector<2x126xf32> -> vector<2x128xf32>
    %c0_8 = arith.constant 0 : index
    %c0_9 = arith.constant 0 : index
    %c0_10 = arith.constant 0 : index
    %32 = vector.load %arg3[%c0_8, %c0_9, %c0_10] : memref<3x2x128xf32, #tpu.memory_space<vmem>>, vector<1x2x128xf32>
    %33 = vector.shape_cast %32 : vector<1x2x128xf32> to vector<2x128xf32>
    %34 = vector.shape_cast %29 : vector<2x128xf32> to vector<1x2x128xf32>
    tpu.vector_store %arg3[%c0_8, %c0_9, %c0_10], %34 {strides = array<i32>} : memref<3x2x128xf32, #tpu.memory_space<vmem>>, vector<1x2x128xf32>,
    %c1 = arith.constant 1 : index
    %c0_11 = arith.constant 0 : index
    %c0_12 = arith.constant 0 : index
    %35 = vector.load %arg3[%c1, %c0_11, %c0_12] : memref<3x2x128xf32, #tpu.memory_space<vmem>>, vector<1x2x128xf32>
    %36 = vector.shape_cast %35 : vector<1x2x128xf32> to vector<2x128xf32>
    %37 = vector.shape_cast %30 : vector<2x128xf32> to vector<1x2x128xf32>
    tpu.vector_store %arg3[%c1, %c0_11, %c0_12], %37 {strides = array<i32>} : memref<3x2x128xf32, #tpu.memory_space<vmem>>, vector<1x2x128xf32>,
    %c2 = arith.constant 2 : index
    %c0_13 = arith.constant 0 : index
    %c0_14 = arith.constant 0 : index
    %38 = vector.load %arg3[%c2, %c0_13, %c0_14] : memref<3x2x128xf32, #tpu.memory_space<vmem>>, vector<1x2x128xf32>
    %39 = vector.shape_cast %38 : vector<1x2x128xf32> to vector<2x128xf32>
    %40 = vector.shape_cast %31 : vector<2x128xf32> to vector<1x2x128xf32>
    tpu.vector_store %arg3[%c2, %c0_13, %c0_14], %40 {strides = array<i32>} : memref<3x2x128xf32, #tpu.memory_space<vmem>>, vector<1x2x128xf32>,
    return
  }
}

</mosaic_0001>

<llo_original>
// kernel: video_colbert_forward.1
$region0: #{video_colbert_forward.1}
  #allocation0 [shape = 'u32[]', space=smem, size = 0x4, offset = 0x4, fixed_abs, tag = 'smem constant byte address 0x4 - core index']
  #allocation1 [shape = 'u32[144,128]{1,0:T(1,128)}', space=vmem, size = 0x12000, scoped, tag = 'internal scratch']
  %s0 = inlined_call_operand.vmem [shape: bf16[16,32], index: 0, kind: input, shape index: {}]
  %s1 = inlined_call_operand.vmem [shape: bf16[32,128], index: 1, kind: input, shape index: {}]
  %s2 = inlined_call_operand.vmem [shape: f32[1,128], index: 2, kind: input, shape index: {}]
  %s3 = inlined_call_operand.vmem [shape: f32[3,2,128], index: 3, kind: output, shape index: {}]
  %s4 = sld [smem:[#allocation0]]
  $region22: #{video_colbert_forward.1} parent=0
    _
  %s6 = ssub.s32 1, %s4
  %s7 = scalar_select 0, %s6, %s4
  // Predicated region
  $region2: #{video_colbert_forward.1} parent=0 // pred_check
    _
  $region3: #{video_colbert_forward.1} parent=0 // pred_check_branch
    %9 = sbr.rel (0) target = $region5
  $region4: #{video_colbert_forward.1} parent=0 // pred_region
    _
  $region5: #{video_colbert_forward.1} parent=0 // pred_fallthru
    _
  // Predicated region
  $region6: #{video_colbert_forward.1} parent=0 // pred_check
    _
  $region7: #{video_colbert_forward.1} parent=0 // pred_check_branch
    %11 = sbr.rel (0) target = $region9
  $region8: #{video_colbert_forward.1} parent=0 // pred_region
    _
  $region9: #{video_colbert_forward.1} parent=0 // pred_fallthru
    _
  // Predicated region
  $region10: #{video_colbert_forward.1} parent=0 // pred_check
    _
  $region11: #{video_colbert_forward.1} parent=0 // pred_check_branch
    %13 = sbr.rel (0) target = $region13
  $region12: #{video_colbert_forward.1} parent=0 // pred_region
    _
  $region13: #{video_colbert_forward.1} parent=0 // pred_fallthru
    _
  %v15 = vld [vmem:[%s0] sm:$0xf]
  %v16 = vld [vmem:[%s0 + $0x4] sm:$0xf]
  %v17 = vld [vmem:[%s1] sm:$0xf]
  %v18 = vld [vmem:[%s1 + $0x4] sm:$0xf]
  %v19 = vld [vmem:[%s1 + $0x8] sm:$0xf]
  %v20 = vld [vmem:[%s1 + $0xc] sm:$0xf]
  %v21 = vld [vmem:[%s2] sm:$0x1]
  %v23 = vlaneseq
  %v24 = vshrl.u32 %v23, 7
  %v25 = vsub.s32 0, %v24
  %v26 = vrot.slane %v21, %v25
  %v30 = vunpack.c.l.b16 %v15
  %v31 = vunpack.c.l.b16 %v16
  %v32 = vpack.c.b16 %v31, %v30
  %v37 = vunpack.c.l.b16 %v17
  %v38 = vunpack.c.l.b16 %v18
  %v39 = vunpack.c.l.b16 %v19
  %v40 = vunpack.c.l.b16 %v20
  %v41 = vpack.c.b16 %v38, %v37
  %v42 = vpack.c.b16 %v40, %v39
  %vm45 = vcmask 261120
  %v47 = vsel %vm45, %v32, 0
  %49 = vmatprep.subr.bf16.mxu0 0
  %50 = vmatpush1.bf16.msra.mxu0 0
  %51 = vmatprep.subr.bf16.mxu0 0
  %52 = vmatpush1.bf16.msra.mxu0 0
  %53 = vmatprep.subr.bf16.mxu0 0
  %54 = vmatpush1.bf16.msra.mxu0 0
  %55 = vmatprep.subr.bf16.mxu0 0
  %56 = vmatpush1.bf16.msra.mxu0 0
  %57 = vmatprep.subr.bf16.mxu0 0
  %58 = vmatpush1.bf16.msra.mxu0 0
  %59 = vmatprep.subr.bf16.mxu0 0
  %60 = vmatpush1.bf16.msra.mxu0 0
  %61 = vmatprep.subr.bf16.mxu0 0
  %62 = vmatpush1.bf16.msra.mxu0 %v42
  %63 = vmatprep.subr.bf16.mxu0 0
  %64 = vmatpush1.bf16.msra.mxu0 %v41
  %65 = vmatprep.subr.bf16.mxu0 0
  %66 = vmatpush2.bf16.msra.mxu0 0
  %67 = vmatprep.subr.bf16.mxu0 0
  %68 = vmatpush2.bf16.msra.mxu0 0
  %69 = vmatprep.subr.bf16.mxu0 0
  %70 = vmatpush2.bf16.msra.mxu0 0
  %71 = vmatprep.subr.bf16.mxu0 0
  %72 = vmatpush2.bf16.msra.mxu0 0
  %73 = vmatprep.subr.bf16.mxu0 0
  %74 = vmatpush2.bf16.msra.mxu0 0
  %75 = vmatprep.subr.bf16.mxu0 0
  %76 = vmatpush2.bf16.msra.mxu0 0
  %77 = vmatprep.subr.bf16.mxu0 0
  %78 = vmatpush2.bf16.msra.mxu0 0
  %79 = vmatprep.subr.bf16.mxu0 0
  %80 = vmatpush2.bf16.msra.mxu0 0
  %81 = vmatprep.mubr.bf16.mxu0 0
  %82 = vmatmul.mubr.bf16.gmra.mxu0 %v47
  %v83 = vpop.f32.mrf.mxu0
  %v84 = vadd.f32 %v26, %v83
  %v85 = vpop.f32.mrf.mxu0
  %v86 = vpop.f32.mrf.mxu0
  %v87 = vadd.f32 %v26, %v86
  %v88 = vpop.f32.mrf.mxu0
  %89 = vdwg.mxu0
  %92 = vrot.lane.b32.xlu0 %v84, 64
  %v93 = vpop.permute.xlu0 %92
  %94 = vrot.lane.b32.xlu0 %v87, 64
  %v95 = vpop.permute.xlu0 %94
  %v98 = vmax.f32 %v84, %v93
  %v99 = vmax.f32 %v87, %v95
  %102 = vrot.lane.b32.xlu0 %v98, 96
  %v103 = vpop.permute.xlu0 %102
  %104 = vrot.lane.b32.xlu0 %v99, 96
  %v105 = vpop.permute.xlu0 %104
  %v108 = vmax.f32 %v98, %v103
  %v109 = vmax.f32 %v99, %v105
  %112 = vrot.lane.b32.xlu0 %v108, 112
  %v113 = vpop.permute.xlu0 %112
  %114 = vrot.lane.b32.xlu0 %v109, 112
  %v115 = vpop.permute.xlu0 %114
  %v118 = vmax.f32 %v108, %v113
  %v119 = vmax.f32 %v109, %v115
  %122 = vrot.lane.b32.xlu0 %v118, 120
  %v123 = vpop.permute.xlu0 %122
  %124 = vrot.lane.b32.xlu0 %v119, 120
  %v125 = vpop.permute.xlu0 %124
  %v128 = vmax.f32 %v118, %v123
  %v129 = vmax.f32 %v119, %v125
  %132 = vrot.lane.b32.xlu0 %v128, 124
  %v133 = vpop.permute.xlu0 %132
  %134 = vrot.lane.b32.xlu0 %v129, 124
  %v135 = vpop.permute.xlu0 %134
  %v138 = vmax.f32 %v128, %v133
  %v139 = vmax.f32 %v129, %v135
  %vm140 = vcmask 31744
  %v141 = vsel %vm140, %v138, 0.0
  %v142 = vrot.slane %v141, 4
  %v143 = vadd.f32 %v141, %v142
  %v144 = vrot.slane %v143, 2
  %v145 = vadd.f32 %v143, %v144
  %v146 = vrot.slane %v145, 1
  %v147 = vadd.f32 %v145, %v146
  %v148 = vsel %vm140, %v139, 0.0
  %v149 = vrot.slane %v148, 4
  %v150 = vadd.f32 %v148, %v149
  %v151 = vrot.slane %v150, 2
  %v152 = vadd.f32 %v150, %v151
  %v153 = vrot.slane %v152, 1
  %v154 = vadd.f32 %v152, %v153
  %v155 = vrcp.pop 8.0
  %v156 = vmul.f32 %v147, %v155
  %v157 = vmul.f32 %v154, %v155
  %160 = vrot.lane.b32.xlu0 %v156, 126
  %v161 = vpop.permute.xlu0 %160
  %162 = vrot.lane.b32.xlu0 %v157, 126
  %v163 = vpop.permute.xlu0 %162
  %v166 = vadd.f32 %v156, %v161
  %v167 = vadd.f32 %v157, %v163
  %v170 = vrot.slane %v167, 7
  %vm171 = vcmask 1041409
  %v172 = vsel %vm171, %v170, %v166
  %vm174 = vcmask 15360
  %v175 = vsel %vm174, %v172, 0.0
  %v176 = vsel %vm171, %v157, %v156
  %v178 = vsel %vm174, %v176, 0.0
  %179 = vrot.lane.b32.xlu0 %v176, 126
  %v180 = vpop.permute.xlu0 %179
  %v182 = vsel %vm174, %v180, 0.0
  %183 = vst [vmem:[%s3] sm:$0x3] %v175
  %s184 = scalar_lea.vmem %s3, 2
  %185 = vst [vmem:[%s184] sm:$0x3] %v178
  %s186 = scalar_lea.vmem %s3, 4
  %187 = vst [vmem:[%s186] sm:$0x3] %v182
  // Predicated region
  $region14: #{video_colbert_forward.1} parent=0 // pred_check
    _
  $region15: #{video_colbert_forward.1} parent=0 // pred_check_branch
    %189 = sbr.rel (0) target = $region17
  $region16: #{video_colbert_forward.1} parent=0 // pred_region
    _
  $region17: #{video_colbert_forward.1} parent=0 // pred_fallthru
    _
  // Predicated region
  $region18: #{video_colbert_forward.1} parent=0 // pred_check
    _
  $region19: #{video_colbert_forward.1} parent=0 // pred_check_branch
    %191 = sbr.rel (0) target = $region21
  $region20: #{video_colbert_forward.1} parent=0 // pred_region
    _
  $region21: #{video_colbert_forward.1} parent=0 // pred_fallthru
    _

</llo_original>
